<compile_context>
chip_gen: v5e
topology: v5e:2x2
jax: 0.10.0
libtpu: 0.0.40
codegen_flags: <defaults>
</compile_context>

<pallas_src>
import functools

import jax
import jax.numpy as jnp
from jax.experimental import pallas as pl
from jax.experimental.pallas import tpu as pltpu


# ---------------------------------------------------------------------------
# Small-graph path: single invocation, everything resident in VMEM (no grid).
# ---------------------------------------------------------------------------
def _gnn_critic_small_kernel(adj_ref, x_ref, wg_ref, bg_ref,
                             w1_ref, b1_ref, w2_ref, b2_ref, w3_ref, b3_ref,
                             o_ref):
    x = x_ref[...]                                                     # [N, C] f32
    xw = jnp.dot(x, wg_ref[...], preferred_element_type=jnp.float32)  # [N, C] f32
    # bf16 MXU pass for the O(N^2) aggregation, f32 accumulation.
    h = jnp.dot(adj_ref[...], xw.astype(adj_ref.dtype),
                preferred_element_type=jnp.float32)                   # [N, C] f32
    h = jnp.maximum(h + bg_ref[...], 0.0)                             # GCN bias + relu
    z = h + x                                                         # residual
    # Node-sum as a matmul (MXU) instead of an XLU sublane reduction.
    ones = jnp.ones((1, z.shape[0]), jnp.float32)
    pooled = jnp.dot(ones, z, preferred_element_type=jnp.float32)     # [1, C]
    y = jnp.maximum(jnp.dot(pooled, w1_ref[...],
                            preferred_element_type=jnp.float32) + b1_ref[...], 0.0)
    y = jnp.maximum(jnp.dot(y, w2_ref[...],
                            preferred_element_type=jnp.float32) + b2_ref[...], 0.0)
    y = jnp.dot(y, w3_ref[...], preferred_element_type=jnp.float32) + b3_ref[...]
    o_ref[...] = y


def _gnn_critic_forward_small(adj_norm, x, params):
    wg, bg, w1, b1, w2, b2, w3, b3 = params
    vmem_specs = [pl.BlockSpec(memory_space=pltpu.MemorySpace.VMEM)
                  for _ in range(10)]
    out = pl.pallas_call(
        _gnn_critic_small_kernel,
        out_shape=jax.ShapeDtypeStruct((1, 1), jnp.float32),
        in_specs=vmem_specs,
        out_specs=pl.BlockSpec(memory_space=pltpu.MemorySpace.VMEM),
    )(adj_norm.astype(jnp.bfloat16), x, wg, bg, w1, b1, w2, b2, w3, b3)
    return out.reshape(1)


# ---------------------------------------------------------------------------
# Large-graph path: row-tiled adjacency, pooled accumulator, MLP on last step.
# ---------------------------------------------------------------------------
def _gnn_critic_tiled_kernel(n_rows, adj_ref, x_ref, wg_ref, bg_ref,
                             w1_ref, b1_ref, w2_ref, b2_ref, w3_ref, b3_ref,
                             o_ref, xw_ref, pooled_ref):
    i = pl.program_id(0)
    tm = adj_ref.shape[0]

    @pl.when(i == 0)
    def _init():
        x = x_ref[...]                                                 # [Np, C] f32
        xw = jnp.dot(x, wg_ref[...], preferred_element_type=jnp.float32)
        xw_ref[...] = xw.astype(xw_ref.dtype)                          # cache X@Wg (bf16)
        # Residual contribution sum_n x[n, :], computed once via the MXU.
        ones = jnp.ones((1, x.shape[0]), jnp.float32)
        pooled_ref[...] = jnp.dot(ones, x, preferred_element_type=jnp.float32)

    # Per-tile GCN aggregation: relu(A_tile @ (X Wg) + bg), bf16 MXU, f32 acc.
    h = jnp.dot(adj_ref[...], xw_ref[...],
                preferred_element_type=jnp.float32)                    # [tm, C] f32
    h = jnp.maximum(h + bg_ref[...], 0.0)
    # Masked row-sum as a matmul; the mask zeroes padded rows (index >= n_rows),
    # so relu(0 + bg) on padded rows never leaks into the pooled accumulator.
    rows = i * tm + jax.lax.broadcasted_iota(jnp.int32, (1, tm), 1)
    mask = (rows < n_rows).astype(jnp.float32)
    pooled_ref[...] += jnp.dot(mask, h, preferred_element_type=jnp.float32)

    @pl.when(i == pl.num_programs(0) - 1)
    def _final():
        pooled = pooled_ref[...]
        y = jnp.maximum(jnp.dot(pooled, w1_ref[...],
                                preferred_element_type=jnp.float32) + b1_ref[...], 0.0)
        y = jnp.maximum(jnp.dot(y, w2_ref[...],
                                preferred_element_type=jnp.float32) + b2_ref[...], 0.0)
        y = jnp.dot(y, w3_ref[...], preferred_element_type=jnp.float32) + b3_ref[...]
        o_ref[...] = y


def gnn_critic_forward_tiled(adj_norm, x, params, *, tile_rows=None):
    N, C = x.shape
    wg, bg, w1, b1, w2, b2, w3, b3 = params
    H = w1.shape[1]

    # Tile sizing: the double-buffered bf16 adjacency tiles dominate VMEM.
    # Keep one tile <= ~8 MiB so the working set stays within scoped-VMEM
    # defaults on v5e/v6e and comfortably under v7x's 64 MiB physical VMEM.
    if tile_rows is None:
        per_row_bytes = max(N, 8) * 2                       # one bf16 adjacency row
        tile_rows = (8 * 1024 * 1024) // per_row_bytes
    tm = int(tile_rows)
    tm = max(16, min(2048, (tm // 16) * 16))                # bf16-friendly sublanes
    n_pad = int(pl.cdiv(N, tm)) * tm
    grid = n_pad // tm
    pad_n = n_pad - N

    adj_p = jnp.pad(adj_norm, ((0, pad_n), (0, pad_n))).astype(jnp.bfloat16)
    x_p = jnp.pad(x, ((0, pad_n), (0, 0)))

    kernel = functools.partial(_gnn_critic_tiled_kernel, N)

    out = pl.pallas_call(
        kernel,
        out_shape=jax.ShapeDtypeStruct((1, 1), jnp.float32),
        grid_spec=pltpu.PrefetchScalarGridSpec(
            num_scalar_prefetch=0,
            grid=(grid,),
            in_specs=[
                pl.BlockSpec((tm, n_pad), lambda i: (i, 0)),   # adjacency row tile
                pl.BlockSpec((n_pad, C), lambda i: (0, 0)),    # X (resident, DMA'd once)
                pl.BlockSpec((C, C), lambda i: (0, 0)),        # Wg
                pl.BlockSpec((1, C), lambda i: (0, 0)),        # bg
                pl.BlockSpec((C, H), lambda i: (0, 0)),        # W1
                pl.BlockSpec((1, H), lambda i: (0, 0)),        # b1
                pl.BlockSpec((H, H), lambda i: (0, 0)),        # W2
                pl.BlockSpec((1, H), lambda i: (0, 0)),        # b2
                pl.BlockSpec((H, 1), lambda i: (0, 0)),        # W3
                pl.BlockSpec((1, 1), lambda i: (0, 0)),        # b3
            ],
            out_specs=pl.BlockSpec((1, 1), lambda i: (0, 0)),
            scratch_shapes=[
                pltpu.VMEM((n_pad, C), jnp.bfloat16),          # cached X @ Wg
                pltpu.VMEM((1, C), jnp.float32),               # pooled accumulator
            ],
        ),
        compiler_params=pltpu.CompilerParams(
            dimension_semantics=("arbitrary",),                # pooled is an accumulator
            vmem_limit_bytes=32 * 1024 * 1024,                 # explicit (v5e default is 16 MiB)
        ),
    )(adj_p, x_p, wg, bg, w1, b1, w2, b2, w3, b3)
    return out.reshape(1)


def gnn_critic_forward(adj_norm, x, params, *, tile_rows=None):
    """Dispatch: whole-graph-in-VMEM kernel for small N, row-tiled kernel otherwise."""
    N = x.shape[0]
    if N <= 1024:           # dense bf16 A_norm <= 2 MiB -> keep it fully resident
        return _gnn_critic_forward_small(adj_norm, x, params)
    return gnn_critic_forward_tiled(adj_norm, x, params, tile_rows=tile_rows)
    # TODO(synk): for large sparse graphs, replace the dense adjacency with a
    # CSR gather via PrefetchScalarGridSpec so traffic is O(E*C), not O(N^2).


# ---------------------------------------------------------------------------
# Graph / parameter construction + pure-JAX reference.
# ---------------------------------------------------------------------------
def build_normalized_adjacency(edge_index, num_nodes):
    """Dense GCN-normalized adjacency with self loops: D^-1/2 (A + I) D^-1/2.

    A_norm[target, source], so out = A_norm @ x aggregates source messages into
    targets (PyG source_to_target flow).
    """
    src, dst = edge_index[0], edge_index[1]
    loops = jnp.arange(num_nodes, dtype=edge_index.dtype)
    src = jnp.concatenate([src, loops])
    dst = jnp.concatenate([dst, loops])
    a = jnp.zeros((num_nodes, num_nodes), jnp.float32).at[dst, src].add(1.0)
    deg = a.sum(axis=1)
    dinv = jnp.where(deg > 0, 1.0 / jnp.sqrt(deg), 0.0)
    return dinv[:, None] * a * dinv[None, :]


def init_params(key, in_channels, hidden=32):
    ks = jax.random.split(key, 8)
    s = 0.1
    wg = s * jax.random.normal(ks[0], (in_channels, in_channels), jnp.float32)
    bg = s * jax.random.normal(ks[1], (1, in_channels), jnp.float32)
    w1 = s * jax.random.normal(ks[2], (in_channels, hidden), jnp.float32)
    b1 = s * jax.random.normal(ks[3], (1, hidden), jnp.float32)
    w2 = s * jax.random.normal(ks[4], (hidden, hidden), jnp.float32)
    b2 = s * jax.random.normal(ks[5], (1, hidden), jnp.float32)
    w3 = s * jax.random.normal(ks[6], (hidden, 1), jnp.float32)
    b3 = s * jax.random.normal(ks[7], (1, 1), jnp.float32)
    return wg, bg, w1, b1, w2, b2, w3, b3


def reference_forward(adj_norm, x, params, *, mimic_bf16=False):
    wg, bg, w1, b1, w2, b2, w3, b3 = params
    hi = jax.lax.Precision.HIGHEST
    xw = jnp.dot(x, wg, precision=hi)
    if mimic_bf16:
        adj_norm = adj_norm.astype(jnp.bfloat16).astype(jnp.float32)
        xw = xw.astype(jnp.bfloat16).astype(jnp.float32)
    h = jnp.maximum(jnp.dot(adj_norm, xw, precision=hi) + bg, 0.0)
    z = h + x
    pooled = jnp.sum(z, axis=0, keepdims=True)
    y = jnp.maximum(jnp.dot(pooled, w1, precision=hi) + b1, 0.0)
    y = jnp.maximum(jnp.dot(y, w2, precision=hi) + b2, 0.0)
    y = jnp.dot(y, w3, precision=hi) + b3
    return y.reshape(1)


def _ring_edges(n):
    idx = jnp.arange(n, dtype=jnp.int32)
    nxt = jnp.roll(idx, -1)
    return jnp.stack([jnp.concatenate([idx, nxt]),
                      jnp.concatenate([nxt, idx])], axis=0)


if __name__ == "__main__":
    key = jax.random.PRNGKey(0)
    k_x, k_p, k_x2 = jax.random.split(key, 3)

    # --- small graph: exercises the no-grid, fully-resident VMEM path -------
    N, C = 16, 8
    x = jax.random.normal(k_x, (N, C), jnp.float32)
    edge_index = _ring_edges(N)                       # [2, 32] bidirectional ring
    adj_norm = build_normalized_adjacency(edge_index, N)
    params = init_params(k_p, C)

    out_small = jax.block_until_ready(gnn_critic_forward(adj_norm, x, params))
    assert out_small.shape == (1,)
    ref_mirror = reference_forward(adj_norm, x, params, mimic_bf16=True)
    ref_f32 = reference_forward(adj_norm, x, params, mimic_bf16=False)
    assert jnp.allclose(out_small, ref_mirror, atol=2e-3, rtol=2e-3), (out_small, ref_mirror)
    assert jnp.allclose(out_small, ref_f32, atol=5e-2, rtol=5e-2), (out_small, ref_f32)

    # --- larger graph: exercises the row-tiled accumulator path (N % TM != 0,
    #     so the padded-row masking is also covered) ---------------------------
    N2 = 300
    x2 = jax.random.normal(k_x2, (N2, C), jnp.float32)
    adj_norm2 = build_normalized_adjacency(_ring_edges(N2), N2)
    out_big = jax.block_until_ready(
        gnn_critic_forward_tiled(adj_norm2, x2, params, tile_rows=128))
    ref2_mirror = reference_forward(adj_norm2, x2, params, mimic_bf16=True)
    ref2_f32 = reference_forward(adj_norm2, x2, params, mimic_bf16=False)
    assert out_big.shape == (1,)
    assert jnp.allclose(out_big, ref2_mirror, atol=2e-3, rtol=2e-3), (out_big, ref2_mirror)
    assert jnp.allclose(out_big, ref2_f32, atol=5e-2, rtol=5e-2), (out_big, ref2_f32)

    print("KERNEL_OK")
</pallas_src>

<mosaic_0001>
module attributes {stable_mosaic.version = 11 : i64} {
  func.func @_gnn_critic_small_kernel(%arg0: memref<16x16xbf16, #tpu.memory_space<vmem>>, %arg1: memref<16x8xf32, #tpu.memory_space<vmem>>, %arg2: memref<8x8xf32, #tpu.memory_space<vmem>>, %arg3: memref<1x8xf32, #tpu.memory_space<vmem>>, %arg4: memref<8x32xf32, #tpu.memory_space<vmem>>, %arg5: memref<1x32xf32, #tpu.memory_space<vmem>>, %arg6: memref<32x32xf32, #tpu.memory_space<vmem>>, %arg7: memref<1x32xf32, #tpu.memory_space<vmem>>, %arg8: memref<32x1xf32, #tpu.memory_space<vmem>>, %arg9: memref<1x1xf32, #tpu.memory_space<vmem>>, %arg10: memref<1x1xf32, #tpu.memory_space<vmem>>) attributes {dimension_semantics = [], scalar_prefetch = 0 : i64, scratch_operands = 0 : i64, tpu.core_type = #tpu.core_type<tc>} {
    %c0 = arith.constant 0 : index
    %c0_0 = arith.constant 0 : index
    %0 = vector.load %arg1[%c0, %c0_0] : memref<16x8xf32, #tpu.memory_space<vmem>>, vector<16x8xf32>
    %c0_1 = arith.constant 0 : index
    %c0_2 = arith.constant 0 : index
    %1 = vector.load %arg2[%c0_1, %c0_2] : memref<8x8xf32, #tpu.memory_space<vmem>>, vector<8x8xf32>
    %cst = arith.constant dense<0.000000e+00> : vector<16x8xf32>
    %2 = tpu.matmul %0, %1, %cst {dimension_numbers = #tpu.dot_dimension_numbers<[1], [0], [0], [1], [0, 0, 1, 1], [], []>} : vector<16x8xf32>, vector<8x8xf32>, vector<16x8xf32> -> vector<16x8xf32>
    %c0_3 = arith.constant 0 : index
    %c0_4 = arith.constant 0 : index
    %3 = vector.load %arg0[%c0_3, %c0_4] : memref<16x16xbf16, #tpu.memory_space<vmem>>, vector<16x16xbf16>
    %4 = arith.truncf %2 : vector<16x8xf32> to vector<16x8xbf16>
    %cst_5 = arith.constant dense<0.000000e+00> : vector<16x8xf32>
    %5 = tpu.matmul %3, %4, %cst_5 {dimension_numbers = #tpu.dot_dimension_numbers<[1], [0], [0], [1], [0, 0, 1, 1], [], []>} : vector<16x16xbf16>, vector<16x8xbf16>, vector<16x8xf32> -> vector<16x8xf32>
    %c0_6 = arith.constant 0 : index
    %c0_7 = arith.constant 0 : index
    %6 = vector.load %arg3[%c0_6, %c0_7] : memref<1x8xf32, #tpu.memory_space<vmem>>, vector<1x8xf32>
    %7 = vector.broadcast %6 : vector<1x8xf32> to vector<16x8xf32>
    %8 = arith.addf %5, %7 : vector<16x8xf32>
    %cst_8 = arith.constant 0.000000e+00 : f32
    %9 = vector.broadcast %cst_8 : f32 to vector<16x8xf32>
    %10 = arith.maximumf %8, %9 : vector<16x8xf32>
    %11 = arith.addf %10, %0 : vector<16x8xf32>
    %cst_9 = arith.constant 1.000000e+00 : f32
    %12 = vector.broadcast %cst_9 : f32 to vector<1x16xf32>
    %cst_10 = arith.constant dense<0.000000e+00> : vector<1x8xf32>
    %13 = tpu.matmul %12, %11, %cst_10 {dimension_numbers = #tpu.dot_dimension_numbers<[1], [0], [0], [1], [0, 0, 1, 1], [], []>} : vector<1x16xf32>, vector<16x8xf32>, vector<1x8xf32> -> vector<1x8xf32>
    %c0_11 = arith.constant 0 : index
    %c0_12 = arith.constant 0 : index
    %14 = vector.load %arg4[%c0_11, %c0_12] : memref<8x32xf32, #tpu.memory_space<vmem>>, vector<8x32xf32>
    %cst_13 = arith.constant dense<0.000000e+00> : vector<1x32xf32>
    %15 = tpu.matmul %13, %14, %cst_13 {dimension_numbers = #tpu.dot_dimension_numbers<[1], [0], [0], [1], [0, 0, 1, 1], [], []>} : vector<1x8xf32>, vector<8x32xf32>, vector<1x32xf32> -> vector<1x32xf32>
    %c0_14 = arith.constant 0 : index
    %c0_15 = arith.constant 0 : index
    %16 = vector.load %arg5[%c0_14, %c0_15] : memref<1x32xf32, #tpu.memory_space<vmem>>, vector<1x32xf32>
    %17 = arith.addf %15, %16 : vector<1x32xf32>
    %cst_16 = arith.constant 0.000000e+00 : f32
    %18 = vector.broadcast %cst_16 : f32 to vector<1x32xf32>
    %19 = arith.maximumf %17, %18 : vector<1x32xf32>
    %c0_17 = arith.constant 0 : index
    %c0_18 = arith.constant 0 : index
    %20 = vector.load %arg6[%c0_17, %c0_18] : memref<32x32xf32, #tpu.memory_space<vmem>>, vector<32x32xf32>
    %cst_19 = arith.constant dense<0.000000e+00> : vector<1x32xf32>
    %21 = tpu.matmul %19, %20, %cst_19 {dimension_numbers = #tpu.dot_dimension_numbers<[1], [0], [0], [1], [0, 0, 1, 1], [], []>} : vector<1x32xf32>, vector<32x32xf32>, vector<1x32xf32> -> vector<1x32xf32>
    %c0_20 = arith.constant 0 : index
    %c0_21 = arith.constant 0 : index
    %22 = vector.load %arg7[%c0_20, %c0_21] : memref<1x32xf32, #tpu.memory_space<vmem>>, vector<1x32xf32>
    %23 = arith.addf %21, %22 : vector<1x32xf32>
    %cst_22 = arith.constant 0.000000e+00 : f32
    %24 = vector.broadcast %cst_22 : f32 to vector<1x32xf32>
    %25 = arith.maximumf %23, %24 : vector<1x32xf32>
    %c0_23 = arith.constant 0 : index
    %c0_24 = arith.constant 0 : index
    %26 = vector.load %arg8[%c0_23, %c0_24] : memref<32x1xf32, #tpu.memory_space<vmem>>, vector<32x1xf32>
    %cst_25 = arith.constant dense<0.000000e+00> : vector<1x1xf32>
    %27 = tpu.matmul %25, %26, %cst_25 {dimension_numbers = #tpu.dot_dimension_numbers<[1], [0], [0], [1], [0, 0, 1, 1], [], []>} : vector<1x32xf32>, vector<32x1xf32>, vector<1x1xf32> -> vector<1x1xf32>
    %c0_26 = arith.constant 0 : index
    %c0_27 = arith.constant 0 : index
    %28 = vector.load %arg9[%c0_26, %c0_27] : memref<1x1xf32, #tpu.memory_space<vmem>>, vector<1x1xf32>
    %29 = arith.addf %27, %28 : vector<1x1xf32>
    %c0_28 = arith.constant 0 : index
    %c0_29 = arith.constant 0 : index
    %30 = vector.load %arg10[%c0_28, %c0_29] : memref<1x1xf32, #tpu.memory_space<vmem>>, vector<1x1xf32>
    tpu.vector_store %arg10[%c0_28, %c0_29], %29 {strides = array<i32>} : memref<1x1xf32, #tpu.memory_space<vmem>>, vector<1x1xf32>,
    return
  }
}

</mosaic_0001>

<llo_original>
// kernel: tpu_custom_call.1
$region0: #{tpu_custom_call.1}
  #allocation0 [shape = 'u32[]', space=smem, size = 0x4, offset = 0x4, fixed_abs, tag = 'smem constant byte address 0x4 - core index']
  #allocation1 [shape = 'u32[72,128]{1,0:T(1,128)}', space=vmem, size = 0x9000, scoped, tag = 'internal scratch']
  #allocation2 [shape = 'f32[1,1]{1,0:T(1,128)S(1)}', space=vmem, size = 0x200, scoped, tag = 'scoped memory for tpu_custom_call.1']
  %s0 = inlined_call_operand.vmem [shape: bf16[16,16], index: 0, kind: input, shape index: {}]
  %s1 = inlined_call_operand.vmem [shape: f32[16,8], index: 1, kind: input, shape index: {}]
  %s2 = inlined_call_operand.vmem [shape: f32[8,8], index: 2, kind: input, shape index: {}]
  %s3 = inlined_call_operand.vmem [shape: f32[1,8], index: 3, kind: input, shape index: {}]
  %s4 = inlined_call_operand.vmem [shape: f32[8,32], index: 4, kind: input, shape index: {}]
  %s5 = inlined_call_operand.vmem [shape: f32[1,32], index: 5, kind: input, shape index: {}]
  %s6 = inlined_call_operand.vmem [shape: f32[32,32], index: 6, kind: input, shape index: {}]
  %s7 = inlined_call_operand.vmem [shape: f32[1,32], index: 7, kind: input, shape index: {}]
  %s8 = inlined_call_operand.vmem [shape: f32[32,1], index: 8, kind: input, shape index: {}]
  %s9 = inlined_call_operand.<no memory space> [shape: f32[1,1], index: 9, kind: input, shape index: {}]
  %s10 = inlined_call_operand.hbm [shape: f32[1,1], index: 10, kind: output, shape index: {}]
  %s11 = sld [smem:[#allocation0]]
  $region50: #{tpu_custom_call.1} parent=0
    _
  %s13 = ssub.s32 1, %s11
  %s14 = scalar_select 0, %s13, %s11
  %v15 = vstv %s9
  %16 = vst [vmem:[#allocation2] sm:$0x1] %v15
  $region1: #{tpu_custom_call.1} parent=0
    #allocation3 [shape = 'u8[512]{0}', space=vmem, size = 0x400, scoped, tag = 'output window, operand 0, single buffered']
    #allocation4 [shape = 's32[1]{0}', space=sflag, size = 0x4, scoped, tag = 'scoped memory for tpu_custom_call.1']
    %17 = vsyncpa [#allocation4], 0
    // Predicated region
    $region2: #{tpu_custom_call.1} parent=1 // pred_check
      _
    $region3: #{tpu_custom_call.1} parent=1 // pred_check_branch
      %19 = sbr.rel (0) target = $region5
    $region4: #{tpu_custom_call.1} parent=1 // pred_region
      _
    $region5: #{tpu_custom_call.1} parent=1 // pred_fallthru
      _
    // Predicated region
    $region6: #{tpu_custom_call.1} parent=1 // pred_check
      _
    $region7: #{tpu_custom_call.1} parent=1 // pred_check_branch
      %21 = sbr.rel (0) target = $region9
    $region8: #{tpu_custom_call.1} parent=1 // pred_region
      _
    $region9: #{tpu_custom_call.1} parent=1 // pred_fallthru
      _
    // Predicated region
    $region10: #{tpu_custom_call.1} parent=1 // pred_check
      _
    $region11: #{tpu_custom_call.1} parent=1 // pred_check_branch
      %23 = sbr.rel (0) target = $region13
    $region12: #{tpu_custom_call.1} parent=1 // pred_region
      _
    $region13: #{tpu_custom_call.1} parent=1 // pred_fallthru
      _
    // Predicated region
    $region14: #{tpu_custom_call.1} parent=1 // pred_check
      _
    $region15: #{tpu_custom_call.1} parent=1 // pred_check_branch
      %25 = sbr.rel (0) target = $region17
    $region16: #{tpu_custom_call.1} parent=1 // pred_region
      _
    $region17: #{tpu_custom_call.1} parent=1 // pred_fallthru
      _
    // Predicated region
    $region18: #{tpu_custom_call.1} parent=1 // pred_check
      _
    $region19: #{tpu_custom_call.1} parent=1 // pred_check_branch
      %27 = sbr.rel (0) target = $region21
    $region20: #{tpu_custom_call.1} parent=1 // pred_region
      _
    $region21: #{tpu_custom_call.1} parent=1 // pred_fallthru
      _
    // Predicated region
    $region22: #{tpu_custom_call.1} parent=1 // pred_check
      _
    $region23: #{tpu_custom_call.1} parent=1 // pred_check_branch
      %29 = sbr.rel (0) target = $region25
    $region24: #{tpu_custom_call.1} parent=1 // pred_region
      _
    $region25: #{tpu_custom_call.1} parent=1 // pred_fallthru
      _
    // Predicated region
    $region26: #{tpu_custom_call.1} parent=1 // pred_check
      _
    $region27: #{tpu_custom_call.1} parent=1 // pred_check_branch
      %31 = sbr.rel (0) target = $region29
    $region28: #{tpu_custom_call.1} parent=1 // pred_region
      _
    $region29: #{tpu_custom_call.1} parent=1 // pred_fallthru
      _
    // Predicated region
    $region30: #{tpu_custom_call.1} parent=1 // pred_check
      _
    $region31: #{tpu_custom_call.1} parent=1 // pred_check_branch
      %33 = sbr.rel (0) target = $region33
    $region32: #{tpu_custom_call.1} parent=1 // pred_region
      _
    $region33: #{tpu_custom_call.1} parent=1 // pred_fallthru
      _
    // Predicated region
    $region34: #{tpu_custom_call.1} parent=1 // pred_check
      _
    $region35: #{tpu_custom_call.1} parent=1 // pred_check_branch
      %35 = sbr.rel (0) target = $region37
    $region36: #{tpu_custom_call.1} parent=1 // pred_region
      _
    $region37: #{tpu_custom_call.1} parent=1 // pred_fallthru
      _
    // Predicated region
    $region38: #{tpu_custom_call.1} parent=1 // pred_check
      _
    $region39: #{tpu_custom_call.1} parent=1 // pred_check_branch
      %37 = sbr.rel (0) target = $region41
    $region40: #{tpu_custom_call.1} parent=1 // pred_region
      _
    $region41: #{tpu_custom_call.1} parent=1 // pred_fallthru
      _
    %v39 = vld [vmem:[%s1] sm:$0xff]
    %v40 = vld [vmem:[%s1 + $0x8] sm:$0xff]
    %v41 = vld [vmem:[%s2] sm:$0xff]
    %vm42 = vcmask 64512
    %v44 = vsel %vm42, %v39, 0
    %v47 = vsel %vm42, %v40, 0
    %49 = vmatpush.msra.mxu0 0.0
    %50 = vmatpush.msra.mxu0 0.0
    %51 = vmatpush.msra.mxu0 0.0
    %52 = vmatpush.msra.mxu0 0.0
    %53 = vmatpush.msra.mxu0 0.0
    %54 = vmatpush.msra.mxu0 0.0
    %55 = vmatpush.msra.mxu0 0.0
    %56 = vmatpush.msra.mxu0 0.0
    %57 = vmatpush.msra.mxu0 0.0
    %58 = vmatpush.msra.mxu0 0.0
    %59 = vmatpush.msra.mxu0 0.0
    %60 = vmatpush.msra.mxu0 0.0
    %61 = vmatpush.msra.mxu0 0.0
    %62 = vmatpush.msra.mxu0 0.0
    %63 = vmatpush.msra.mxu0 0.0
    %64 = vmatpush.msra.mxu0 %v41
    %65 = vmatmul.f32.gmra.mxu0 %v44
    %v66 = vpop.f32.mrf.mxu0
    %v67 = vadd.f32 0.0, %v66
    %68 = vmatmul.f32.gmra.mxu0 %v47
    %v69 = vpop.f32.mrf.mxu0
    %v70 = vadd.f32 0.0, %v69
    %71 = vdwg.mxu0
    %v72 = vld [vmem:[%s0] sm:$0xf]
    %v73 = vld [vmem:[%s0 + $0x4] sm:$0xf]
    %v74 = vpack.c.bf16 %v70, %v67
    %v75 = vld [vmem:[%s3] sm:$0x1]
    %v77 = vperm.slane %v75, 0
    %v81 = vunpack.c.l.b16 %v72
    %v82 = vunpack.c.l.b16 %v73
    %v83 = vpack.c.b16 %v82, %v81
    %vm84 = vcmask 130048
    %v86 = vsel %vm84, %v83, 0
    %88 = vmatpush.bf16.msra.mxu0 0
    %89 = vmatpush.bf16.msra.mxu0 0
    %90 = vmatpush.bf16.msra.mxu0 0
    %91 = vmatpush.bf16.msra.mxu0 0
    %92 = vmatpush.bf16.msra.mxu0 0
    %93 = vmatpush.bf16.msra.mxu0 0
    %94 = vmatpush.bf16.msra.mxu0 0
    %95 = vmatpush.bf16.msra.mxu0 %v74
    %96 = vmatmul.bf16.gmra.mxu0 %v86
    %v97 = vpop.f32.mrf.mxu0
    %v98 = vadd.f32 %v77, %v97
    %v99 = vpop.f32.mrf.mxu0
    %v100 = vadd.f32 %v77, %v99
    %101 = vdwg.mxu0
    %v102 = vmax.f32 %v98, 0.0
    %v103 = vmax.f32 %v100, 0.0
    %v104 = vadd.f32 %v102, %v39
    %v105 = vadd.f32 %v103, %v40
    %v107 = vsel %vm84, 1.0, 0
    %109 = vmatpush.msra.mxu0 0.0
    %110 = vmatpush.msra.mxu0 0.0
    %111 = vmatpush.msra.mxu0 0.0
    %112 = vmatpush.msra.mxu0 0.0
    %113 = vmatpush.msra.mxu0 0.0
    %114 = vmatpush.msra.mxu0 0.0
    %115 = vmatpush.msra.mxu0 0.0
    %116 = vmatpush.msra.mxu0 0.0
    %117 = vmatpush.msra.mxu0 0.0
    %118 = vmatpush.msra.mxu0 0.0
    %119 = vmatpush.msra.mxu0 0.0
    %120 = vmatpush.msra.mxu0 0.0
    %121 = vmatpush.msra.mxu0 0.0
    %122 = vmatpush.msra.mxu0 0.0
    %123 = vmatpush.msra.mxu0 %v105
    %124 = vmatpush.msra.mxu0 %v104
    %125 = vmatmul.f32.gmra.mxu0 %v107
    %v126 = vpop.f32.mrf.mxu0
    %v127 = vadd.f32 0.0, %v126
    %128 = vdwg.mxu0
    %v129 = vld [vmem:[%s4] sm:$0xff]
    %v130 = vld [vmem:[%s5] sm:$0x1]
    %v132 = vsel %vm42, %v127, 0
    %134 = vmatpush.msra.mxu0 0.0
    %135 = vmatpush.msra.mxu0 0.0
    %136 = vmatpush.msra.mxu0 0.0
    %137 = vmatpush.msra.mxu0 0.0
    %138 = vmatpush.msra.mxu0 0.0
    %139 = vmatpush.msra.mxu0 0.0
    %140 = vmatpush.msra.mxu0 0.0
    %141 = vmatpush.msra.mxu0 0.0
    %142 = vmatpush.msra.mxu0 0.0
    %143 = vmatpush.msra.mxu0 0.0
    %144 = vmatpush.msra.mxu0 0.0
    %145 = vmatpush.msra.mxu0 0.0
    %146 = vmatpush.msra.mxu0 0.0
    %147 = vmatpush.msra.mxu0 0.0
    %148 = vmatpush.msra.mxu0 0.0
    %149 = vmatpush.msra.mxu0 %v129
    %150 = vmatmul.f32.gmra.mxu0 %v132
    %v151 = vpop.f32.mrf.mxu0
    %v152 = vadd.f32 %v130, %v151
    %153 = vdwg.mxu0
    %v154 = vmax.f32 %v152, 0.0
    %v155 = vld [vmem:[%s6] sm:$0xff]
    %v156 = vld [vmem:[%s6 + $0x8] sm:$0xff]
    %v157 = vld [vmem:[%s6 + $0x10] sm:$0xff]
    %v158 = vld [vmem:[%s6 + $0x18] sm:$0xff]
    %v159 = vld [vmem:[%s7] sm:$0x1]
    %vm160 = vcmask 261120
    %v162 = vsel %vm160, %v154, 0
    %164 = vmatpush.msra.mxu0 0.0
    %165 = vmatpush.msra.mxu0 0.0
    %166 = vmatpush.msra.mxu0 0.0
    %167 = vmatpush.msra.mxu0 0.0
    %168 = vmatpush.msra.mxu0 0.0
    %169 = vmatpush.msra.mxu0 0.0
    %170 = vmatpush.msra.mxu0 0.0
    %171 = vmatpush.msra.mxu0 0.0
    %172 = vmatpush.msra.mxu0 0.0
    %173 = vmatpush.msra.mxu0 0.0
    %174 = vmatpush.msra.mxu0 0.0
    %175 = vmatpush.msra.mxu0 0.0
    %176 = vmatpush.msra.mxu0 %v158
    %177 = vmatpush.msra.mxu0 %v157
    %178 = vmatpush.msra.mxu0 %v156
    %179 = vmatpush.msra.mxu0 %v155
    %180 = vmatmul.f32.gmra.mxu0 %v162
    %v181 = vpop.f32.mrf.mxu0
    %v182 = vadd.f32 %v159, %v181
    %183 = vdwg.mxu0
    %v184 = vmax.f32 %v182, 0.0
    %v185 = vld [vmem:[%s8] sm:$0xff]
    %v186 = vld [vmem:[%s8 + $0x8] sm:$0xff]
    %v187 = vld [vmem:[%s8 + $0x10] sm:$0xff]
    %v188 = vld [vmem:[%s8 + $0x18] sm:$0xff]
    %v189 = vld [vmem:[#allocation2] sm:$0x1]
    %v191 = vsel %vm160, %v184, 0
    %193 = vmatpush.msra.mxu0 0.0
    %194 = vmatpush.msra.mxu0 0.0
    %195 = vmatpush.msra.mxu0 0.0
    %196 = vmatpush.msra.mxu0 0.0
    %197 = vmatpush.msra.mxu0 0.0
    %198 = vmatpush.msra.mxu0 0.0
    %199 = vmatpush.msra.mxu0 0.0
    %200 = vmatpush.msra.mxu0 0.0
    %201 = vmatpush.msra.mxu0 0.0
    %202 = vmatpush.msra.mxu0 0.0
    %203 = vmatpush.msra.mxu0 0.0
    %204 = vmatpush.msra.mxu0 0.0
    %205 = vmatpush.msra.mxu0 %v188
    %206 = vmatpush.msra.mxu0 %v187
    %207 = vmatpush.msra.mxu0 %v186
    %208 = vmatpush.msra.mxu0 %v185
    %209 = vmatmul.f32.gmra.mxu0 %v191
    %v210 = vpop.f32.mrf.mxu0
    %v211 = vadd.f32 %v189, %v210
    %212 = vdwg.mxu0
    %vm213 = vcmask 0
    %214 = vst.msk [vmem:[#allocation3] sm:$0x1] %vm213, %v211
    // Predicated region
    $region42: #{tpu_custom_call.1} parent=1 // pred_check
      _
    $region43: #{tpu_custom_call.1} parent=1 // pred_check_branch
      %216 = sbr.rel (0) target = $region45
    $region44: #{tpu_custom_call.1} parent=1 // pred_region
      %218 = vsyncadd [#allocation4], 0
      %s220 = sshll.u32 [#allocation3], 4
      %s221 = int_to_ptr.vmem [resolvable:$true] %s220
      %s222 = sshll.u32 %s10, 4
      %s223 = int_to_ptr.hbm [resolvable:$true] %s222
      %225 = dma.vmem_to_hbm [thread:$0]  %s221, 16, %s223, [#allocation4]
    $region45: #{tpu_custom_call.1} parent=1 // pred_fallthru
      _
    // Predicated region
    $region46: #{tpu_custom_call.1} parent=1 // pred_check
      _
    $region47: #{tpu_custom_call.1} parent=1 // pred_check_branch
      %227 = sbr.rel (0) target = $region49
    $region48: #{tpu_custom_call.1} parent=1 // pred_region
      %229 = dma.done [#allocation4], 16
    $region49: #{tpu_custom_call.1} parent=1 // pred_fallthru
      _
    %230 = vsyncpa [#allocation4], 1

</llo_original>
